<compile_context>
chip_gen: v6e
topology: v6e:2x2x1
jax: 0.10.0
libtpu: 0.0.40
codegen_flags: <defaults>
</compile_context>

<pallas_src>
import functools

import jax
import jax.numpy as jnp
from jax.experimental import pallas as pl
from jax.experimental.pallas import tpu as pltpu

_LANES = 128
_TARGET_BLOCK_BYTES = 1 << 20          # ~1 MiB per input block (per buffer)
_VMEM_LIMIT_BYTES = 32 * 1024 * 1024   # explicit scoped-VMEM limit
_MIN_BLOCKS_FOR_CORE_SPLIT = 8         # only split across cores w/ enough blocks
_ALL_KINDS = ("mse", "l1")             # kinds produced by one fused HBM pass


class LossError(Exception):
    pass


# ---------------------------------------------------------------------------
# Hardware query
# ---------------------------------------------------------------------------
@functools.lru_cache(maxsize=1)
def _tensorcores_per_device():
    """Best-effort TensorCore count per device: 2 on megacore chips
    (v4/v5p/v7x), 1 on v2/v3/v5e/v6e.  Only used to decide whether the
    leading "parallel" grid axis is worth enabling."""
    try:
        info = pltpu.get_tpu_info()
        for attr in ("num_cores", "core_count", "num_tensorcores",
                     "tensorcore_count"):
            v = getattr(info, attr, None)
            if isinstance(v, int) and v >= 1:
                return v
    except Exception:
        pass
    try:
        kind = jax.devices()[0].device_kind.lower()
    except Exception:
        return 1
    if any(tag in kind for tag in ("lite", "v5e", "v6e", "v2", "v3")):
        return 1          # single-TensorCore-per-device families
    return 2              # v4 / v5p / v7x expose 2 TCs behind one device


# ---------------------------------------------------------------------------
# Pallas reduction kernel
# ---------------------------------------------------------------------------
def _metric_reduce_kernel(pred_ref, tgt_ref, out_ref, acc_ref, *,
                          kinds, total_rows, blocks_per_split, tile_rows,
                          acc_sub, needs_mask):
    """Streaming per-lane sums of (pred-tgt)^2 / |pred-tgt| over (tr,128) blocks."""
    c = pl.program_id(0)      # core split axis ("parallel")
    i = pl.program_id(1)      # reduction axis  ("arbitrary")

    @pl.when(i == 0)
    def _():
        acc_ref[...] = jnp.zeros_like(acc_ref)

    def accumulate(mask):
        d = pred_ref[...].astype(jnp.float32) - tgt_ref[...].astype(jnp.float32)
        for ki, kind in enumerate(kinds):
            m = d * d if kind == "mse" else jnp.abs(d)
            if mask is not None:
                m = jnp.where(mask, m, 0.0)
            if acc_sub == 8:
                # Cross-vreg VALU adds only; the intra-vreg sublane (XLU) and
                # cross-lane reduces happen once, in the wrapper epilogue.
                part = m.reshape(tile_rows // 8, 8, _LANES).sum(axis=0)
            else:
                part = jnp.sum(m, axis=0, keepdims=True)
            acc_ref[ki * acc_sub:(ki + 1) * acc_sub, :] += part

    if needs_mask:
        # Only blocks overhanging the logical end of the array pay for the
        # iota/compare/select; every full block takes the unmasked fast path.
        row_start = (c * blocks_per_split + i) * tile_rows
        block_is_full = row_start + tile_rows <= total_rows

        @pl.when(block_is_full)
        def _():
            accumulate(None)

        @pl.when(jnp.logical_not(block_is_full))
        def _():
            row_ids = row_start + jax.lax.broadcasted_iota(
                jnp.int32, (tile_rows, _LANES), 0)
            accumulate(row_ids < total_rows)
    else:
        accumulate(None)

    @pl.when(i == pl.num_programs(1) - 1)
    def _():
        out_ref[0] = acc_ref[...]


def _launch_metric_kernel(pred2d, tgt2d, kinds, tile_rows):
    """Per-kind global sums over a (rows, 128) tensor pair: one Pallas launch."""
    rows = pred2d.shape[0]
    nk = len(kinds)

    tr = min(rows, tile_rows)          # full-extent block for small inputs
    nblocks = pl.cdiv(rows, tr)
    num_splits = (2 if (_tensorcores_per_device() >= 2
                        and nblocks >= _MIN_BLOCKS_FOR_CORE_SPLIT) else 1)
    bpc = pl.cdiv(nblocks, num_splits)
    acc_sub = 8 if tr % 8 == 0 else 1
    acc_rows = nk * acc_sub
    needs_mask = (rows % tr != 0) or (bpc * num_splits != nblocks)

    if needs_mask:
        def in_map(c, i):
            # Overhanging steps of the last core split re-read a valid block;
            # their contribution is masked to zero inside the kernel.
            return (jnp.minimum(c * bpc + i, nblocks - 1), 0)
    else:
        def in_map(c, i):
            return (c * bpc + i, 0)

    kernel = functools.partial(
        _metric_reduce_kernel, kinds=kinds, total_rows=rows,
        blocks_per_split=bpc, tile_rows=tr, acc_sub=acc_sub,
        needs_mask=needs_mask)

    out = pl.pallas_call(
        kernel,
        out_shape=jax.ShapeDtypeStruct((num_splits, acc_rows, _LANES),
                                       jnp.float32),
        grid_spec=pltpu.PrefetchScalarGridSpec(
            num_scalar_prefetch=0,
            grid=(num_splits, bpc),
            in_specs=[
                pl.BlockSpec((tr, _LANES), in_map),
                pl.BlockSpec((tr, _LANES), in_map),
            ],
            out_specs=pl.BlockSpec((1, acc_rows, _LANES),
                                   lambda c, i: (c, 0, 0)),
            scratch_shapes=[pltpu.VMEM((acc_rows, _LANES), jnp.float32)],
        ),
        compiler_params=pltpu.CompilerParams(
            dimension_semantics=("parallel", "arbitrary"),
            vmem_limit_bytes=_VMEM_LIMIT_BYTES,
        ),
    )(pred2d, tgt2d)

    # Tiny epilogue reduce (<= num_splits * nk * 8 * 128 elems), fused under jit.
    per_kind = jnp.sum(out.reshape(num_splits, nk, acc_sub, _LANES),
                       axis=(0, 2, 3))
    return tuple(per_kind[k] for k in range(nk))


# ---------------------------------------------------------------------------
# Differentiable, jitted wrapper
# ---------------------------------------------------------------------------
def _metric_sums_impl(prediction, target, *, kinds, tile_rows):
    """Global sums of every requested metric kind in (at most) one HBM pass."""
    assert prediction.shape == target.shape, (prediction.shape, target.shape)
    pred_flat = jnp.ravel(prediction)
    tgt_flat = jnp.ravel(target)
    n = pred_flat.shape[0]
    rows = n // _LANES
    aligned = rows * _LANES

    sums = None
    if rows > 0:
        # 128-aligned prefix.  When n % 128 == 0 this is a pure (bitcast)
        # reshape: no copy, a single streaming pass over HBM.
        pred2d = (pred_flat if aligned == n
                  else pred_flat[:aligned]).reshape(rows, _LANES)
        tgt2d = (tgt_flat if aligned == n
                 else tgt_flat[:aligned]).reshape(rows, _LANES)
        sums = _launch_metric_kernel(pred2d, tgt2d, kinds, tile_rows)
    if aligned != n:
        # < 128-element ragged tail in plain JAX -- avoids padding (and hence
        # re-materializing) the whole tensor in HBM.
        d = (pred_flat[aligned:].astype(jnp.float32)
             - tgt_flat[aligned:].astype(jnp.float32))
        tail = tuple(jnp.sum(d * d) if k == "mse" else jnp.sum(jnp.abs(d))
                     for k in kinds)
        sums = tail if sums is None else tuple(a + b for a, b in zip(sums, tail))
    return sums


@functools.lru_cache(maxsize=None)
def _make_metric_sums(kinds, tile_rows):
    """jit-compiled, differentiable (pred, tgt) -> tuple of per-kind sums."""

    def impl(pred, tgt):
        return _metric_sums_impl(pred, tgt, kinds=kinds, tile_rows=tile_rows)

    @jax.custom_vjp
    def sums(pred, tgt):
        return impl(pred, tgt)

    def fwd(pred, tgt):
        return impl(pred, tgt), (pred, tgt)

    def bwd(res, g):
        # Analytic elementwise backward (cheaper than any autodiff'd kernel):
        # d/dpred sum (p-t)^2 = 2(p-t);  d/dpred sum |p-t| = sign(p-t).
        pred, tgt = res
        d = pred.astype(jnp.float32) - tgt.astype(jnp.float32)
        grad = jnp.zeros_like(d)
        for kind, gk in zip(kinds, g):
            grad = grad + ((2.0 * gk) * d if kind == "mse" else gk * jnp.sign(d))
        return grad.astype(pred.dtype), (-grad).astype(tgt.dtype)

    sums.defvjp(fwd, bwd)
    return jax.jit(sums)


def _metric_sums(prediction, target, kinds, tile_rows=None):
    if tile_rows is None:
        itemsize = jnp.dtype(prediction.dtype).itemsize
        # ~1 MiB per input block: 2048 rows for f32, 4096 for bf16, ...
        tile_rows = max(512, _TARGET_BLOCK_BYTES // (_LANES * itemsize))
    return _make_metric_sums(tuple(kinds), int(tile_rows))(prediction, target)


# Per-forward memoization: the first metric touching a (prediction, target)
# pair triggers ONE fused launch producing every supported kind; later metrics
# on the same tensors (l1 + mse, the MSE inside PSNR, ...) are cache hits.
_METRIC_CACHE = None   # dict while inside BaseLossPallas.forward, else None


def _metric_mean(prediction, target, kind):
    global _METRIC_CACHE
    n = prediction.size
    if _METRIC_CACHE is None:
        return _metric_sums(prediction, target, (kind,))[0] / n
    key = (id(prediction), id(target))
    hit = _METRIC_CACHE.get(key)
    if hit is None or hit[0] is not prediction or hit[1] is not target:
        sums = _metric_sums(prediction, target, _ALL_KINDS)
        hit = (prediction, target, dict(zip(_ALL_KINDS, sums)))
        _METRIC_CACHE[key] = hit
    return hit[2][kind] / n


def _pallas_metric_mean(prediction, target, kind, tile_rows=None):
    """mean metric via the Pallas streaming reduction (direct / test use)."""
    return (_metric_sums(prediction, target, (kind,), tile_rows=tile_rows)[0]
            / prediction.size)


# Metric callables backed by the Pallas kernel ------------------------------
def mse_metric(prediction, target, weight=1.0):
    return weight * _metric_mean(prediction, target, "mse")


def l1_metric(prediction, target, weight=1.0):
    return weight * _metric_mean(prediction, target, "l1")


def psnr_metric(prediction, target, weight=1.0):
    mse = _metric_mean(prediction, target, "mse")
    return -10.0 * jnp.log10(jnp.maximum(mse, 1e-12))


# ---------------------------------------------------------------------------
# Container classes mirroring BaseLoss / LossMetricItem / QualityMetricItem.
# ---------------------------------------------------------------------------
class _MetricItem:
    def __init__(self, name, metric_func, weight=None):
        self.name = name
        self.metric_func = metric_func
        self.weight = 1.0 if weight is None else weight
        self._train_vals = []
        self._eval_vals = []

    def apply(self, train, accumulate, kwargs, stop_grad=False):
        val = self.metric_func(weight=self.weight, **kwargs)
        if stop_grad:
            val = jax.lax.stop_gradient(val)
        if accumulate:
            (self._train_vals if train else self._eval_vals).append(val)
        return val

    def reset(self):
        self._train_vals = []
        self._eval_vals = []

    def getAverage(self):
        t = float(jnp.mean(jnp.stack(self._train_vals))) if self._train_vals else 0.0
        e = float(jnp.mean(jnp.stack(self._eval_vals))) if self._eval_vals else 0.0
        return t, e


class BaseLossPallas:
    """JAX/Pallas port of BaseLoss: weighted sum of per-metric reductions."""

    def __init__(self, activate_logging=True):
        self.loss_metrics = []
        self.quality_metrics = []
        self.activate_logging = activate_logging
        self.training = True

    def addLossMetric(self, name, metric, weight=None):
        self.loss_metrics.append(_MetricItem(name, metric, weight))

    def addQualityMetric(self, name, metric):
        self.quality_metrics.append(_MetricItem(name, metric, 1.0))

    def reset(self):
        for item in self.loss_metrics + self.quality_metrics:
            item.reset()

    # TODO(synk): wandb logging has no Pallas/JAX equivalent; log() only
    # returns the accumulated averages instead of pushing to a logger.
    def log(self, iteration):
        if self.activate_logging:
            return {item.name: item.getAverage()
                    for item in self.loss_metrics + self.quality_metrics}
        return {}

    def forward(self, configurations):
        global _METRIC_CACHE
        _METRIC_CACHE = {}
        item = None
        try:
            if self.activate_logging:
                for item in self.quality_metrics:
                    # torch.no_grad() equivalent: quality values are
                    # logging-only and carry no gradient.
                    item.apply(train=self.training, accumulate=True,
                               kwargs=configurations[item.name],
                               stop_grad=True)
            vals = [
                item.apply(train=self.training,
                           accumulate=self.activate_logging,
                           kwargs=configurations[item.name])
                for item in self.loss_metrics
            ]
            return jnp.stack(vals).sum()
        except KeyError:
            raise LossError(
                f'missing argument configuration for loss "{item.name}"')
        except TypeError:
            raise LossError(
                f'invalid argument configuration for loss "{item.name}"')
        finally:
            _METRIC_CACHE = None

    __call__ = forward


if __name__ == "__main__":
    key = jax.random.PRNGKey(0)
    k1, k2, k3, k4, k5, k6 = jax.random.split(key, 6)

    # NCHW inputs, small shapes
    pred_a = jax.random.normal(k1, (2, 4, 16, 16), jnp.float32)
    tgt_a = jax.random.normal(k2, (2, 4, 16, 16), jnp.float32)
    pred_b = jax.random.normal(k3, (2, 4, 16, 16), jnp.float32)
    tgt_b = jax.random.normal(k4, (2, 4, 16, 16), jnp.float32)

    loss = BaseLossPallas(activate_logging=True)
    loss.addLossMetric("mse_loss", mse_metric, weight=1.0)
    loss.addLossMetric("l1_loss", l1_metric, weight=0.5)
    loss.addQualityMetric("psnr", psnr_metric)

    configurations = {
        "mse_loss": {"prediction": pred_a, "target": tgt_a},
        "l1_loss": {"prediction": pred_b, "target": tgt_b},
        "psnr": {"prediction": pred_a, "target": tgt_a},
    }

    total = jax.block_until_ready(loss(configurations))

    # pure-JAX reference check (loss metrics only; quality metrics are logged)
    ref = (1.0 * jnp.mean((pred_a - tgt_a) ** 2)
           + 0.5 * jnp.mean(jnp.abs(pred_b - tgt_b)))
    assert jnp.allclose(total, ref, rtol=1e-5, atol=1e-6), (total, ref)

    # custom_vjp backward check (analytic elementwise gradient).
    g = jax.block_until_ready(
        jax.grad(lambda p: mse_metric(p, tgt_a, weight=1.0))(pred_a))
    g_ref = 2.0 * (pred_a - tgt_a) / pred_a.size
    assert jnp.allclose(g, g_ref, rtol=1e-5, atol=1e-7), "grad mismatch"

    # Exercise the ragged tail (n % 128 != 0), the masked partial last block,
    # the clamped core split and the multi-block path with a tiny forced tile.
    pred_c = jax.random.normal(k5, (2, 4, 25, 40), jnp.float32)  # 8000 elems
    tgt_c = jax.random.normal(k6, (2, 4, 25, 40), jnp.float32)
    got = jax.block_until_ready(
        _pallas_metric_mean(pred_c, tgt_c, "l1", tile_rows=8))
    ref_c = jnp.mean(jnp.abs(pred_c - tgt_c))
    assert jnp.allclose(got, ref_c, rtol=1e-5, atol=1e-6), (got, ref_c)

    print("KERNEL_OK")
</pallas_src>

<mosaic_0001>
module attributes {stable_mosaic.version = 11 : i64} {
  func.func @_metric_reduce_kernel(%arg0: i32, %arg1: i32, %arg2: memref<16x128xf32, #tpu.memory_space<vmem>>, %arg3: memref<16x128xf32, #tpu.memory_space<vmem>>, %arg4: memref<1x16x128xf32, #tpu.memory_space<vmem>>, %arg5: memref<16x128xf32, #tpu.memory_space<vmem>>) attributes {dimension_semantics = [#tpu.dimension_semantics<parallel>, #tpu.dimension_semantics<arbitrary>], iteration_bounds = array<i64: 1, 1>, scalar_prefetch = 0 : i64, scratch_operands = 1 : i64, tpu.core_type = #tpu.core_type<tc>, window_params = [{transform_indices = @transform_0, window_bounds = array<i64: 16, 128>}, {transform_indices = @transform_1, window_bounds = array<i64: 16, 128>}, {transform_indices = @transform_2, window_bounds = array<i64: 1, 16, 128>}]} {
    %c0_i32 = arith.constant 0 : i32
    %0 = arith.cmpi eq, %arg1, %c0_i32 : i32
    %1 = arith.extui %0 : i1 to i32
    %c0_i32_0 = arith.constant 0 : i32
    %2 = arith.cmpi ne, %1, %c0_i32_0 : i32
    scf.if %2 {
      %cst_14 = arith.constant 0.000000e+00 : f32
      %21 = vector.broadcast %cst_14 : f32 to vector<16x128xf32>
      %c0_15 = arith.constant 0 : index
      %c0_16 = arith.constant 0 : index
      %22 = vector.load %arg5[%c0_15, %c0_16] : memref<16x128xf32, #tpu.memory_space<vmem>>, vector<16x128xf32>
      tpu.vector_store %arg5[%c0_15, %c0_16], %21 {strides = array<i32>} : memref<16x128xf32, #tpu.memory_space<vmem>>, vector<16x128xf32>,
    } else {
    }
    %c0 = arith.constant 0 : index
    %c0_1 = arith.constant 0 : index
    %3 = vector.load %arg2[%c0, %c0_1] : memref<16x128xf32, #tpu.memory_space<vmem>>, vector<16x128xf32>
    %c0_2 = arith.constant 0 : index
    %c0_3 = arith.constant 0 : index
    %4 = vector.load %arg3[%c0_2, %c0_3] : memref<16x128xf32, #tpu.memory_space<vmem>>, vector<16x128xf32>
    %5 = arith.subf %3, %4 : vector<16x128xf32>
    %6 = arith.mulf %5, %5 : vector<16x128xf32>
    %7 = vector.shape_cast %6 : vector<16x128xf32> to vector<2x8x128xf32>
    %cst = arith.constant dense<0.000000e+00> : vector<8x128xf32>
    %8 = vector.multi_reduction <add>, %7, %cst [0] : vector<2x8x128xf32> to vector<8x128xf32>
    %c0_4 = arith.constant 0 : index
    %c0_5 = arith.constant 0 : index
    %9 = vector.load %arg5[%c0_4, %c0_5] : memref<16x128xf32, #tpu.memory_space<vmem>>, vector<8x128xf32>
    %10 = arith.addf %9, %8 : vector<8x128xf32>
    %c0_6 = arith.constant 0 : index
    %c0_7 = arith.constant 0 : index
    %11 = vector.load %arg5[%c0_6, %c0_7] : memref<16x128xf32, #tpu.memory_space<vmem>>, vector<8x128xf32>
    tpu.vector_store %arg5[%c0_6, %c0_7], %10 {strides = array<i32>} : memref<16x128xf32, #tpu.memory_space<vmem>>, vector<8x128xf32>,
    %12 = math.absf %5 : vector<16x128xf32>
    %13 = vector.shape_cast %12 : vector<16x128xf32> to vector<2x8x128xf32>
    %cst_8 = arith.constant dense<0.000000e+00> : vector<8x128xf32>
    %14 = vector.multi_reduction <add>, %13, %cst_8 [0] : vector<2x8x128xf32> to vector<8x128xf32>
    %c8 = arith.constant 8 : index
    %c0_9 = arith.constant 0 : index
    %15 = vector.load %arg5[%c8, %c0_9] : memref<16x128xf32, #tpu.memory_space<vmem>>, vector<8x128xf32>
    %16 = arith.addf %15, %14 : vector<8x128xf32>
    %c8_10 = arith.constant 8 : index
    %c0_11 = arith.constant 0 : index
    %17 = vector.load %arg5[%c8_10, %c0_11] : memref<16x128xf32, #tpu.memory_space<vmem>>, vector<8x128xf32>
    tpu.vector_store %arg5[%c8_10, %c0_11], %16 {strides = array<i32>} : memref<16x128xf32, #tpu.memory_space<vmem>>, vector<8x128xf32>,
    %c0_i32_12 = arith.constant 0 : i32
    %18 = arith.cmpi eq, %arg1, %c0_i32_12 : i32
    %19 = arith.extui %18 : i1 to i32
    %c0_i32_13 = arith.constant 0 : i32
    %20 = arith.cmpi ne, %19, %c0_i32_13 : i32
    scf.if %20 {
      %c0_14 = arith.constant 0 : index
      %c0_15 = arith.constant 0 : index
      %21 = vector.load %arg5[%c0_14, %c0_15] : memref<16x128xf32, #tpu.memory_space<vmem>>, vector<16x128xf32>
      %c0_16 = arith.constant 0 : index
      %c0_17 = arith.constant 0 : index
      %c0_18 = arith.constant 0 : index
      %22 = vector.load %arg4[%c0_16, %c0_17, %c0_18] : memref<1x16x128xf32, #tpu.memory_space<vmem>>, vector<1x16x128xf32>
      %23 = vector.shape_cast %22 : vector<1x16x128xf32> to vector<16x128xf32>
      %24 = vector.shape_cast %21 : vector<16x128xf32> to vector<1x16x128xf32>
      tpu.vector_store %arg4[%c0_16, %c0_17, %c0_18], %24 {strides = array<i32>} : memref<1x16x128xf32, #tpu.memory_space<vmem>>, vector<1x16x128xf32>,
    } else {
    }
    return
  }
  func.func @transform_0(%arg0: i32, %arg1: i32) -> (i32, i32) {
    %c1_i32 = arith.constant 1 : i32
    %0 = arith.muli %arg0, %c1_i32 : i32
    %1 = arith.addi %0, %arg1 : i32
    %c0_i32 = arith.constant 0 : i32
    %c0_i32_0 = arith.constant 0 : i32
    return %1, %c0_i32 : i32, i32
  }
  func.func @transform_1(%arg0: i32, %arg1: i32) -> (i32, i32) {
    %c1_i32 = arith.constant 1 : i32
    %0 = arith.muli %arg0, %c1_i32 : i32
    %1 = arith.addi %0, %arg1 : i32
    %c0_i32 = arith.constant 0 : i32
    %c0_i32_0 = arith.constant 0 : i32
    return %1, %c0_i32 : i32, i32
  }
  func.func @transform_2(%arg0: i32, %arg1: i32) -> (i32, i32, i32) {
    %c0_i32 = arith.constant 0 : i32
    %c0_i32_0 = arith.constant 0 : i32
    %c0_i32_1 = arith.constant 0 : i32
    return %arg0, %c0_i32, %c0_i32_0 : i32, i32, i32
  }
}

</mosaic_0001>

<llo_original>
// kernel: sums.1
$region0: #{sums.1}
  #allocation0 [shape = 'u32[]', space=smem, size = 0x4, offset = 0x4, fixed_abs, tag = 'smem constant byte address 0x4 - core index']
  #allocation1 [shape = 'u32[144,128]{1,0:T(1,128)}', space=vmem, size = 0x12000, scoped, tag = 'internal scratch']
  #allocation2 [shape = 'f32[16,128]{1,0:T(8,128)}', space=vmem, size = 0x2000, scoped, tag = 'scratch operand']
  %s0 = inlined_call_operand.vmem [shape: f32[16,128], index: 0, kind: input, shape index: {}]
  %s1 = inlined_call_operand.vmem [shape: f32[16,128], index: 1, kind: input, shape index: {}]
  %s2 = inlined_call_operand.vmem [shape: f32[1,16,128], index: 2, kind: output, shape index: {}]
  %s3 = sld [smem:[#allocation0]]
  $region26: #{sums.1} parent=0
    _
  %s5 = ssub.s32 1, %s3
  %s6 = scalar_select 0, %s5, %s3
  // Predicated region
  $region2: #{sums.1} parent=0 // pred_check
    _
  $region3: #{sums.1} parent=0 // pred_check_branch
    %8 = sbr.rel (0) target = $region5
  $region4: #{sums.1} parent=0 // pred_region
    %s9 = sadd.s32 0, 0
    %s10 = smul.u32 2, %s9
    %p11 = scmp.lt.s32.totalorder %s10, 1
    %s12 = scalar_select %p11, %s10, 1
    %s13 = smul.addr %s12, 8
    %s14 = scalar_lea.vmem %s0, %s13
    %s15 = sadd.s32 0, 0
    %s16 = smul.u32 2, %s15
  $region5: #{sums.1} parent=0 // pred_fallthru
    _
  // Predicated region
  $region6: #{sums.1} parent=0 // pred_check
    _
  $region7: #{sums.1} parent=0 // pred_check_branch
    %18 = sbr.rel (0) target = $region9
  $region8: #{sums.1} parent=0 // pred_region
    %s19 = sadd.s32 0, 0
    %s20 = smul.u32 2, %s19
    %p21 = scmp.lt.s32.totalorder %s20, 1
    %s22 = scalar_select %p21, %s20, 1
    %s23 = smul.addr %s22, 8
    %s24 = scalar_lea.vmem %s1, %s23
    %s25 = sadd.s32 0, 0
    %s26 = smul.u32 2, %s25
  $region9: #{sums.1} parent=0 // pred_fallthru
    _
  %s27 = sadd.s32 0, 0
  %s28 = smul.u32 2, %s27
  %p29 = scmp.lt.s32.totalorder %s28, 1
  %s30 = scalar_select %p29, %s28, 1
  %s31 = smul.addr %s30, 8
  %s32 = scalar_lea.vmem %s0, %s31
  %s33 = sadd.s32 0, 0
  %s34 = smul.u32 2, %s33
  %p35 = scmp.lt.s32.totalorder %s34, 1
  %s36 = scalar_select %p35, %s34, 1
  %s37 = smul.addr %s36, 8
  %s38 = scalar_lea.vmem %s1, %s37
  %s39 = sadd.s32 0, 0
  %s40 = smul.u32 2, %s39
  %p41 = scmp.lt.s32.totalorder %s40, 1
  %s42 = scalar_select %p41, %s40, 1
  %s43 = smul.addr %s42, 8
  %s44 = scalar_lea.vmem %s0, %s43
  %s45 = sadd.s32 0, 0
  %s46 = smul.u32 2, %s45
  %s47 = sadd.s32 0, 0
  %s48 = smul.u32 2, %s47
  %p49 = scmp.lt.s32.totalorder %s48, 1
  %s50 = scalar_select %p49, %s48, 1
  %s51 = smul.addr %s50, 8
  %s52 = scalar_lea.vmem %s1, %s51
  %s53 = sadd.s32 0, 0
  %s54 = smul.u32 2, %s53
  %p55 = scmp.eq.s32.totalorder 0, 0
  // Predicated region
  $region10: #{sums.1} parent=0 // pred_check
    %p56 = pneg %p55
  $region11: #{sums.1} parent=0 // pred_check_branch
    %58 = sbr.rel (%p56) target = $region13
  $region12: #{sums.1} parent=0 // pred_region
    %59 = vst [vmem:[#allocation2] sm:$0xff] 0.0
    %60 = vst [vmem:[#allocation2 + $0x8] sm:$0xff] 0.0
  $region13: #{sums.1} parent=0 // pred_fallthru
    _
  %v61 = vld [vmem:[%s44] sm:$0xff]
  %v62 = vld [vmem:[%s44 + $0x8] sm:$0xff]
  %v63 = vld [vmem:[%s52] sm:$0xff]
  %v64 = vld [vmem:[%s52 + $0x8] sm:$0xff]
  %v65 = vsub.f32 %v61, %v63
  %v66 = vsub.f32 %v62, %v64
  %v67 = vmul.f32 %v65, %v65
  %v68 = vmul.f32 %v66, %v66
  %v69 = vadd.f32 %v67, %v68
  %v70 = vld [vmem:[#allocation2] sm:$0xff]
  %v71 = vadd.f32 %v70, %v69
  %72 = vst [vmem:[#allocation2] sm:$0xff] %v71
  %v73 = vand.u32 2147483647, %v65
  %v74 = vand.u32 2147483647, %v66
  %v75 = vadd.f32 %v73, %v74
  %v76 = vld [vmem:[#allocation2 + $0x8] sm:$0xff]
  %v77 = vadd.f32 %v76, %v75
  %78 = vst [vmem:[#allocation2 + $0x8] sm:$0xff] %v77
  // Predicated region
  $region14: #{sums.1} parent=0 // pred_check
    %p79 = pneg %p55
  $region15: #{sums.1} parent=0 // pred_check_branch
    %81 = sbr.rel (%p79) target = $region17
  $region16: #{sums.1} parent=0 // pred_region
    %v82 = vld [vmem:[#allocation2] sm:$0xff]
    %v83 = vld [vmem:[#allocation2 + $0x8] sm:$0xff]
    %84 = vst [vmem:[%s2] sm:$0xff] %v82
    %85 = vst [vmem:[%s2 + $0x8] sm:$0xff] %v83
  $region17: #{sums.1} parent=0 // pred_fallthru
    _
  // Predicated region
  $region18: #{sums.1} parent=0 // pred_check
    _
  $region19: #{sums.1} parent=0 // pred_check_branch
    %87 = sbr.rel (0) target = $region21
  $region20: #{sums.1} parent=0 // pred_region
    _
  $region21: #{sums.1} parent=0 // pred_fallthru
    _
  // Predicated region
  $region22: #{sums.1} parent=0 // pred_check
    _
  $region23: #{sums.1} parent=0 // pred_check_branch
    %89 = sbr.rel (0) target = $region25
  $region24: #{sums.1} parent=0 // pred_region
    _
  $region25: #{sums.1} parent=0 // pred_fallthru
    _

</llo_original>
